<compile_context>
chip_gen: v5e
topology: v5e:2x2
jax: 0.10.0
libtpu: 0.0.40
codegen_flags: <defaults>
</compile_context>

<pallas_src>
import jax
import jax.numpy as jnp
from jax import lax
from jax.experimental import pallas as pl
from jax.experimental.pallas import tpu as pltpu

BN_EPS = 1e-5
KSIZE = 3
STRIDE = 2


def _round_up(x, m):
    return ((x + m - 1) // m) * m


# ----------------------------------------------------------------------------
# Fused Pallas kernel: maxpool branch + BN-folded conv3x3 branch
# ----------------------------------------------------------------------------
def _polyblock3a_kernel(taps_ref, w_ref, bias_ref, out_ref):
    """taps_ref: (TM, 9*C)       f32  -- lane-dense stride-2 window taps
       w_ref:    (9*C, COUT_P)   bf16 -- conv weights (BN scale folded, COUT padded to 128)
       bias_ref: (1, COUT_P)     f32  -- folded BN bias (zero in pad channels)
       out_ref:  (TM, COUT_P+C)  f32  -- [:, :COUT_P]=conv, [:, COUT_P:]=maxpool
    """
    cout_p = w_ref.shape[-1]                       # 128
    c = out_ref.shape[-1] - cout_p                 # 64
    n_taps = taps_ref.shape[-1] // c               # 9

    taps = taps_ref[...]                           # (TM, 576) f32, loaded once

    # Conv branch: ONE fused MXU matmul, f32 accumulate, f32 epilogue.
    acc = jnp.dot(taps.astype(jnp.bfloat16), w_ref[...],
                  preferred_element_type=jnp.float32)
    conv = jnp.maximum(acc + bias_ref[...], 0.0)

    # MaxPool branch: elementwise max over the 9 taps (static 64-lane slices).
    mx = taps[:, 0:c]
    for t in range(1, n_taps):
        mx = jnp.maximum(mx, taps[:, t * c:(t + 1) * c])

    # Direct slice stores (no in-kernel concat): conv half is lane-dense/aligned.
    out_ref[:, :cout_p] = conv.astype(out_ref.dtype)
    out_ref[:, cout_p:] = mx.astype(out_ref.dtype)


# ----------------------------------------------------------------------------
# JAX glue
# ----------------------------------------------------------------------------
def _extract_taps_lane_dense(x_nhwc):
    """Lane-dense stride-2 window taps: (N*Ho*Wo, 9*C), tap-major then channel."""
    n, h, w, c = x_nhwc.shape
    ho = (h - KSIZE) // STRIDE + 1
    wo = (w - KSIZE) // STRIDE + 1
    taps = []
    for i in range(KSIZE):
        for j in range(KSIZE):
            taps.append(lax.slice(
                x_nhwc,
                (0, i, j, 0),
                (n, i + STRIDE * (ho - 1) + 1, j + STRIDE * (wo - 1) + 1, c),
                (1, STRIDE, STRIDE, 1)))
    taps = jnp.stack(taps, axis=3)                        # (N, Ho, Wo, 9, C)
    return taps.reshape(n * ho * wo, KSIZE * KSIZE * c), (ho, wo)


def polyblock3a_forward(x_nchw, params, row_tile=512):
    """PolyBlock3a forward. x: (N, 64, H, W) -> (N, 160, Ho, Wo)."""
    n, c, h, w = x_nchw.shape
    x_nhwc = jnp.transpose(x_nchw, (0, 2, 3, 1))          # NCHW -> NHWC
    taps, (ho, wo) = _extract_taps_lane_dense(x_nhwc)     # (rows, 9*C)

    cout = params["cout"]                                  # real conv channels (96)
    cout_p = params["w_taps"].shape[-1]                    # padded to 128
    out_w = cout_p + c                                     # 192

    # Row tiling: big blocks, multiple of 8; keep >=2 grid steps when possible
    # so v7x's two TensorCores both get work under "parallel" semantics.
    rows = n * ho * wo
    rows_p = _round_up(rows, 8)
    tm = min(row_tile, rows_p)
    if rows_p // tm < 2 and rows_p >= 16:
        tm = _round_up((rows_p + 1) // 2, 8)
    rows_pad = _round_up(rows_p, tm)
    if rows_pad != rows:
        taps = jnp.pad(taps, ((0, rows_pad - rows), (0, 0)))
    grid = rows_pad // tm

    out = pl.pallas_call(
        _polyblock3a_kernel,
        out_shape=jax.ShapeDtypeStruct((rows_pad, out_w), jnp.float32),
        grid_spec=pltpu.PrefetchScalarGridSpec(
            num_scalar_prefetch=0,
            grid=(grid,),                                  # flattened row axis
            in_specs=[
                pl.BlockSpec((tm, KSIZE * KSIZE * c), lambda r: (r, 0)),
                pl.BlockSpec((KSIZE * KSIZE * c, cout_p), lambda r: (0, 0)),
                pl.BlockSpec((1, cout_p), lambda r: (0, 0)),
            ],
            out_specs=pl.BlockSpec((tm, out_w), lambda r: (r, 0)),
        ),
        compiler_params=pltpu.CompilerParams(
            dimension_semantics=("parallel",),             # engage both TCs on v7x
            vmem_limit_bytes=32 * 1024 * 1024,             # working set is tiny anyway
        ),
    )(taps, params["w_taps"], params["bias"])

    out = out[:rows]                                       # drop padded rows
    conv = out[:, :cout]                                   # drop padded channels
    mx = out[:, cout_p:cout_p + c]
    y = jnp.concatenate([mx, conv], axis=-1)               # [maxpool | conv]
    y = y.reshape(n, ho, wo, c + cout)
    return jnp.transpose(y, (0, 3, 1, 2))                  # back to NCHW


def build_params(key, in_channels=64, out_channels=96):
    """Conv2d(no bias) + BatchNorm(eval) folded into (weights, bias), COUT padded to 128."""
    ks = jax.random.split(key, 5)
    fan_in = in_channels * KSIZE * KSIZE
    w = jax.random.normal(ks[0], (KSIZE, KSIZE, in_channels, out_channels),
                          jnp.float32) / jnp.sqrt(fan_in)
    gamma = 1.0 + 0.1 * jax.random.normal(ks[1], (out_channels,), jnp.float32)
    beta = 0.1 * jax.random.normal(ks[2], (out_channels,), jnp.float32)
    mean = 0.1 * jax.random.normal(ks[3], (out_channels,), jnp.float32)
    var = jax.random.uniform(ks[4], (out_channels,), jnp.float32,
                             minval=0.5, maxval=1.5)
    scale = gamma / jnp.sqrt(var + BN_EPS)
    w_f = w * scale                                        # fold BN scale
    b_f = beta - mean * scale

    cout_p = _round_up(out_channels, 128)                  # 96 -> 128
    w_taps = w_f.reshape(KSIZE * KSIZE * in_channels, out_channels)
    w_taps = jnp.pad(w_taps, ((0, 0), (0, cout_p - out_channels)))
    bias = jnp.pad(b_f, (0, cout_p - out_channels)).reshape(1, cout_p)
    return {
        "w_hwio": w_f,                                     # f32, reference only
        "w_taps": w_taps.astype(jnp.bfloat16),             # (576, 128) bf16 MXU RHS
        "bias": bias,                                      # (1, 128) f32 epilogue
        "cout": out_channels,
    }


# ----------------------------------------------------------------------------
# Pure-JAX reference
# ----------------------------------------------------------------------------
def polyblock3a_ref(x_nchw, params):
    mpool = lax.reduce_window(x_nchw, -jnp.inf, lax.max,
                              (1, 1, KSIZE, KSIZE), (1, 1, STRIDE, STRIDE),
                              "VALID")
    conv = lax.conv_general_dilated(
        x_nchw, params["w_hwio"], (STRIDE, STRIDE), "VALID",
        dimension_numbers=("NCHW", "HWIO", "NCHW"))
    bias = params["bias"][0, :params["cout"]].reshape(1, -1, 1, 1)
    conv = jnp.maximum(conv + bias, 0.0)
    return jnp.concatenate([mpool, conv], axis=1)          # maxpool first, then conv


# ----------------------------------------------------------------------------
if __name__ == "__main__":
    key = jax.random.PRNGKey(0)
    kx, kp = jax.random.split(key)

    N, C, H, W = 2, 64, 17, 17                             # module fixes C=64
    x = jax.random.normal(kx, (N, C, H, W), jnp.float32)
    params = build_params(kp, in_channels=C, out_channels=96)

    y = jax.block_until_ready(polyblock3a_forward(x, params))
    assert y.shape == (N, C + 96, 8, 8), y.shape

    y_ref = jax.block_until_ready(polyblock3a_ref(x, params))

    # MaxPool branch is exact f32 element selection -> tight check.
    assert jnp.allclose(y[:, :C], y_ref[:, :C], atol=1e-6), (
        float(jnp.max(jnp.abs(y[:, :C] - y_ref[:, :C]))))
    # Conv branch uses bf16 MXU operands with f32 accumulate -> looser tolerance.
    assert jnp.allclose(y, y_ref, atol=5e-2, rtol=5e-2), (
        float(jnp.max(jnp.abs(y - y_ref))))

    print("KERNEL_OK")
</pallas_src>

<mosaic_0001>
module attributes {stable_mosaic.version = 11 : i64} {
  func.func @_polyblock3a_kernel(%arg0: i32, %arg1: memref<64x576xf32, #tpu.memory_space<vmem>>, %arg2: memref<576x128xbf16, #tpu.memory_space<vmem>>, %arg3: memref<1x128xf32, #tpu.memory_space<vmem>>, %arg4: memref<64x192xf32, #tpu.memory_space<vmem>>) attributes {dimension_semantics = [#tpu.dimension_semantics<parallel>], iteration_bounds = array<i64: 2>, scalar_prefetch = 0 : i64, scratch_operands = 0 : i64, tpu.core_type = #tpu.core_type<tc>, window_params = [{transform_indices = @transform_0, window_bounds = array<i64: 64, 576>}, {pipeline_mode = #tpu.pipeline_mode<synchronous>, transform_indices = @transform_1, window_bounds = array<i64: 576, 128>}, {pipeline_mode = #tpu.pipeline_mode<synchronous>, transform_indices = @transform_2, window_bounds = array<i64: 1, 128>}, {transform_indices = @transform_3, window_bounds = array<i64: 64, 192>}]} {
    %c0 = arith.constant 0 : index
    %c0_0 = arith.constant 0 : index
    %0 = vector.load %arg1[%c0, %c0_0] : memref<64x576xf32, #tpu.memory_space<vmem>>, vector<64x576xf32>
    %1 = arith.truncf %0 : vector<64x576xf32> to vector<64x576xbf16>
    %c0_1 = arith.constant 0 : index
    %c0_2 = arith.constant 0 : index
    %2 = vector.load %arg2[%c0_1, %c0_2] : memref<576x128xbf16, #tpu.memory_space<vmem>>, vector<576x128xbf16>
    %cst = arith.constant dense<0.000000e+00> : vector<64x128xf32>
    %3 = tpu.matmul %1, %2, %cst {dimension_numbers = #tpu.dot_dimension_numbers<[1], [0], [0], [1], [0, 0, 1, 1], [], []>} : vector<64x576xbf16>, vector<576x128xbf16>, vector<64x128xf32> -> vector<64x128xf32>
    %c0_3 = arith.constant 0 : index
    %c0_4 = arith.constant 0 : index
    %4 = vector.load %arg3[%c0_3, %c0_4] : memref<1x128xf32, #tpu.memory_space<vmem>>, vector<1x128xf32>
    %5 = vector.broadcast %4 : vector<1x128xf32> to vector<64x128xf32>
    %6 = arith.addf %3, %5 : vector<64x128xf32>
    %cst_5 = arith.constant 0.000000e+00 : f32
    %7 = vector.broadcast %cst_5 : f32 to vector<64x128xf32>
    %8 = arith.maximumf %6, %7 : vector<64x128xf32>
    %9 = vector.extract_strided_slice %0 {offsets = [0, 0], sizes = [64, 64], strides = [1, 1]} : vector<64x576xf32> to vector<64x64xf32>
    %10 = vector.extract_strided_slice %0 {offsets = [0, 64], sizes = [64, 64], strides = [1, 1]} : vector<64x576xf32> to vector<64x64xf32>
    %11 = arith.maximumf %9, %10 : vector<64x64xf32>
    %12 = vector.extract_strided_slice %0 {offsets = [0, 128], sizes = [64, 64], strides = [1, 1]} : vector<64x576xf32> to vector<64x64xf32>
    %13 = arith.maximumf %11, %12 : vector<64x64xf32>
    %14 = vector.extract_strided_slice %0 {offsets = [0, 192], sizes = [64, 64], strides = [1, 1]} : vector<64x576xf32> to vector<64x64xf32>
    %15 = arith.maximumf %13, %14 : vector<64x64xf32>
    %16 = vector.extract_strided_slice %0 {offsets = [0, 256], sizes = [64, 64], strides = [1, 1]} : vector<64x576xf32> to vector<64x64xf32>
    %17 = arith.maximumf %15, %16 : vector<64x64xf32>
    %18 = vector.extract_strided_slice %0 {offsets = [0, 320], sizes = [64, 64], strides = [1, 1]} : vector<64x576xf32> to vector<64x64xf32>
    %19 = arith.maximumf %17, %18 : vector<64x64xf32>
    %20 = vector.extract_strided_slice %0 {offsets = [0, 384], sizes = [64, 64], strides = [1, 1]} : vector<64x576xf32> to vector<64x64xf32>
    %21 = arith.maximumf %19, %20 : vector<64x64xf32>
    %22 = vector.extract_strided_slice %0 {offsets = [0, 448], sizes = [64, 64], strides = [1, 1]} : vector<64x576xf32> to vector<64x64xf32>
    %23 = arith.maximumf %21, %22 : vector<64x64xf32>
    %24 = vector.extract_strided_slice %0 {offsets = [0, 512], sizes = [64, 64], strides = [1, 1]} : vector<64x576xf32> to vector<64x64xf32>
    %25 = arith.maximumf %23, %24 : vector<64x64xf32>
    %c0_6 = arith.constant 0 : index
    %c0_7 = arith.constant 0 : index
    %26 = vector.load %arg4[%c0_6, %c0_7] : memref<64x192xf32, #tpu.memory_space<vmem>>, vector<64x128xf32>
    tpu.vector_store %arg4[%c0_6, %c0_7], %8 {strides = array<i32>} : memref<64x192xf32, #tpu.memory_space<vmem>>, vector<64x128xf32>,
    %c0_8 = arith.constant 0 : index
    %c128 = arith.constant 128 : index
    %27 = vector.load %arg4[%c0_8, %c128] : memref<64x192xf32, #tpu.memory_space<vmem>>, vector<64x64xf32>
    tpu.vector_store %arg4[%c0_8, %c128], %25 {strides = array<i32>} : memref<64x192xf32, #tpu.memory_space<vmem>>, vector<64x64xf32>,
    return
  }
  func.func @transform_0(%arg0: i32) -> (i32, i32) {
    %c0_i32 = arith.constant 0 : i32
    %c0_i32_0 = arith.constant 0 : i32
    return %arg0, %c0_i32 : i32, i32
  }
  func.func @transform_1(%arg0: i32) -> (i32, i32) {
    %c0_i32 = arith.constant 0 : i32
    %c0_i32_0 = arith.constant 0 : i32
    %c0_i32_1 = arith.constant 0 : i32
    return %c0_i32, %c0_i32_0 : i32, i32
  }
  func.func @transform_2(%arg0: i32) -> (i32, i32) {
    %c0_i32 = arith.constant 0 : i32
    %c0_i32_0 = arith.constant 0 : i32
    %c0_i32_1 = arith.constant 0 : i32
    return %c0_i32, %c0_i32_0 : i32, i32
  }
  func.func @transform_3(%arg0: i32) -> (i32, i32) {
    %c0_i32 = arith.constant 0 : i32
    %c0_i32_0 = arith.constant 0 : i32
    return %arg0, %c0_i32 : i32, i32
  }
}

</mosaic_0001>

<llo_original>
// kernel: tpu_custom_call.1
$region0: #{tpu_custom_call.1}
  #allocation0 [shape = 'u32[]', space=smem, size = 0x4, offset = 0x4, fixed_abs, tag = 'smem constant byte address 0x4 - core index']
  #allocation1 [shape = 'u32[72,128]{1,0:T(1,128)}', space=vmem, size = 0x9000, scoped, tag = 'internal scratch']
  %s0 = inlined_call_operand.vmem [shape: f32[128,576], index: 0, kind: input, shape index: {}]
  %s1 = inlined_call_operand.vmem [shape: bf16[576,128], index: 1, kind: input, shape index: {}]
  %s2 = inlined_call_operand.vmem [shape: f32[1,128], index: 2, kind: input, shape index: {}]
  %s3 = inlined_call_operand.vmem [shape: f32[128,192], index: 3, kind: output, shape index: {}]
  %s4 = sld [smem:[#allocation0]]
  $region45: #{tpu_custom_call.1} parent=0
    _
  %s6 = ssub.s32 1, %s4
  %s7 = scalar_select 0, %s6, %s4
  loop: start=0, step=1, limit=4
  $region2: #{tpu_custom_call.1} parent=0 // loop_pre_header
    _
  $region3: #{tpu_custom_call.1} parent=0 // loop_header
    %s9 = sphi 0, %s13
    %p10 = scmp.ge.s32.totalorder %s9, 4
    %s19 = sphi 0, %s21
    %s22 = sphi 0, %s19
    %s23 = sphi 0, %s22
    %s39 = sphi 0, %s23
    %s43 = sphi 0, %s43
    %s45 = sphi 0, %s43
    %s46 = sphi 0, %s45
    %s60 = sphi 0, %s46
    %s64 = sphi 0, %s64
    %s66 = sphi 0, %s64
    %s67 = sphi 0, %s66
    %s81 = sphi 0, %s67
    %s87 = sphi 0, %s89
    %s90 = sphi 0, %s87
    %s91 = sphi 0, %s90
    %s107 = sphi 0, %s91
  $region4: #{tpu_custom_call.1} parent=0 // loop_header_branch
    %12 = sbr.rel (%p10) target = $region8
  $region5: #{tpu_custom_call.1} parent=0 // loop_body
    %s14 = ssub.s32 %s9, 1
    %s15 = ssub.s32 %s9, 2
    %s16 = sadd.s32 %s9, 1
    %s17 = ssub.s32 %s9, %s16
    %p18 = scmp.eq.s32.totalorder %s17, 0
    %s20 = sadd.s32 %s19, 1
    %s21 = scalar_select %p18, %s19, %s20
    %p24 = pneg %p18
    %p25 = scmp.eq.s32.totalorder %s9, 1
    %p26 = por %p24, %p25
    %p27 = scmp.ne.s32.totalorder %s19, %s22
    %p28 = scmp.eq.s32.totalorder %s9, 0
    %p29 = por %p27, %p28
    %p30 = scmp.ne.s32.totalorder %s19, %s22
    %p31 = scmp.eq.s32.totalorder %s14, 1
    %p32 = por %p30, %p31
    %p33 = scmp.ne.s32.totalorder %s22, %s23
    %p34 = scmp.eq.s32.totalorder %s14, 0
    %p35 = por %p33, %p34
    %p36 = scmp.ne.s32.totalorder %s22, %s23
    %p37 = scmp.eq.s32.totalorder %s15, 1
    %p38 = por %p36, %p37
    %p40 = scmp.ne.s32.totalorder %s23, %s39
    %p41 = scmp.eq.s32.totalorder %s15, 0
    %p42 = por %p40, %p41
    %s44 = sadd.s32 %s43, 1
    %p47 = scmp.eq.s32.totalorder %s9, 1
    %p48 = scmp.ne.s32.totalorder %s43, %s45
    %p49 = scmp.eq.s32.totalorder %s9, 0
    %p50 = por %p48, %p49
    %p51 = scmp.ne.s32.totalorder %s43, %s45
    %p52 = scmp.eq.s32.totalorder %s14, 1
    %p53 = por %p51, %p52
    %p54 = scmp.ne.s32.totalorder %s45, %s46
    %p55 = scmp.eq.s32.totalorder %s14, 0
    %p56 = por %p54, %p55
    %p57 = scmp.ne.s32.totalorder %s45, %s46
    %p58 = scmp.eq.s32.totalorder %s15, 1
    %p59 = por %p57, %p58
    %p61 = scmp.ne.s32.totalorder %s46, %s60
    %p62 = scmp.eq.s32.totalorder %s15, 0
    %p63 = por %p61, %p62
    %s65 = sadd.s32 %s64, 1
    %p68 = scmp.eq.s32.totalorder %s9, 1
    %p69 = scmp.ne.s32.totalorder %s64, %s66
    %p70 = scmp.eq.s32.totalorder %s9, 0
    %p71 = por %p69, %p70
    %p72 = scmp.ne.s32.totalorder %s64, %s66
    %p73 = scmp.eq.s32.totalorder %s14, 1
    %p74 = por %p72, %p73
    %p75 = scmp.ne.s32.totalorder %s66, %s67
    %p76 = scmp.eq.s32.totalorder %s14, 0
    %p77 = por %p75, %p76
    %p78 = scmp.ne.s32.totalorder %s66, %s67
    %p79 = scmp.eq.s32.totalorder %s15, 1
    %p80 = por %p78, %p79
    %p82 = scmp.ne.s32.totalorder %s67, %s81
    %p83 = scmp.eq.s32.totalorder %s15, 0
    %p84 = por %p82, %p83
    %s85 = ssub.s32 %s9, %s16
    %p86 = scmp.eq.s32.totalorder %s85, 0
    %s88 = sadd.s32 %s87, 1
    %s89 = scalar_select %p86, %s87, %s88
    %p92 = pneg %p86
    %p93 = scmp.eq.s32.totalorder %s9, 1
    %p94 = por %p92, %p93
    %p95 = scmp.ne.s32.totalorder %s87, %s90
    %p96 = scmp.eq.s32.totalorder %s9, 0
    %p97 = por %p95, %p96
    %p98 = scmp.ne.s32.totalorder %s87, %s90
    %p99 = scmp.eq.s32.totalorder %s14, 1
    %p100 = por %p98, %p99
    %p101 = scmp.ne.s32.totalorder %s90, %s91
    %p102 = scmp.eq.s32.totalorder %s14, 0
    %p103 = por %p101, %p102
    %p104 = scmp.ne.s32.totalorder %s90, %s91
    %p105 = scmp.eq.s32.totalorder %s15, 1
    %p106 = por %p104, %p105
    %p108 = scmp.ne.s32.totalorder %s91, %s107
    %p109 = scmp.eq.s32.totalorder %s15, 0
    %p110 = por %p108, %p109
    %p111 = scmp.le.s32.totalorder 1, %s9
    %p112 = scmp.lt.s32.totalorder %s9, 3
    %p113 = pnand %p111, %p112
    %p114 = pneg %p113
    // Predicated region
    $region9: #{tpu_custom_call.1} parent=5 // pred_check
      _
    $region10: #{tpu_custom_call.1} parent=5 // pred_check_branch
      %116 = sbr.rel (%p113) target = $region12
    $region11: #{tpu_custom_call.1} parent=5 // pred_region
      %s117 = ssub.s32 %s9, 1
      // Predicated region
      $region13: #{tpu_custom_call.1} parent=11 // pred_check
        %p118 = pneg %p56
      $region14: #{tpu_custom_call.1} parent=11 // pred_check_branch
        %120 = sbr.rel (%p118) target = $region16
      $region15: #{tpu_custom_call.1} parent=11 // pred_region
        _
      $region16: #{tpu_custom_call.1} parent=11 // pred_fallthru
        _
      // Predicated region
      $region17: #{tpu_custom_call.1} parent=11 // pred_check
        %p121 = pneg %p77
      $region18: #{tpu_custom_call.1} parent=11 // pred_check_branch
        %123 = sbr.rel (%p121) target = $region20
      $region19: #{tpu_custom_call.1} parent=11 // pred_region
        _
      $region20: #{tpu_custom_call.1} parent=11 // pred_fallthru
        _
    $region12: #{tpu_custom_call.1} parent=5 // pred_fallthru
      _
    %p124 = scmp.lt.s32.totalorder %s9, 2
    // Predicated region
    $region21: #{tpu_custom_call.1} parent=5 // pred_check
      %p125 = pneg %p124
    $region22: #{tpu_custom_call.1} parent=5 // pred_check_branch
      %127 = sbr.rel (%p125) target = $region24
    $region23: #{tpu_custom_call.1} parent=5 // pred_region
      // Predicated region
      $region25: #{tpu_custom_call.1} parent=23 // pred_check
        %p128 = pneg %p29
      $region26: #{tpu_custom_call.1} parent=23 // pred_check_branch
        %130 = sbr.rel (%p128) target = $region28
      $region27: #{tpu_custom_call.1} parent=23 // pred_region
        %s131 = smul.u32 8, %s9
        %p132 = scmp.lt.s32.totalorder %s131, 15
        %s133 = scalar_select %p132, %s131, 15
        %s134 = smul.addr %s133, 5
        %s135 = smul.addr %s134, 8
        %s136 = scalar_lea.vmem %s0, %s135
        %s137 = smul.u32 8, %s9
      $region28: #{tpu_custom_call.1} parent=23 // pred_fallthru
        _
    $region24: #{tpu_custom_call.1} parent=5 // pred_fallthru
      _
    %p138 = scmp.le.s32.totalorder 1, %s9
    %p139 = scmp.lt.s32.totalorder %s9, 3
    %p140 = pnand %p138, %p139
    %p141 = pneg %p140
    // Predicated region
    $region29: #{tpu_custom_call.1} parent=5 // pred_check
      _
    $region30: #{tpu_custom_call.1} parent=5 // pred_check_branch
      %143 = sbr.rel (%p140) target = $region32
    $region31: #{tpu_custom_call.1} parent=5 // pred_region
      %s144 = ssub.s32 %s9, 1
      %s145 = smul.u32 8, %s14
      %p146 = scmp.lt.s32.totalorder %s145, 15
      %s147 = scalar_select %p146, %s145, 15
      %s148 = smul.addr %s147, 5
      %s149 = smul.addr %s148, 8
      %s150 = scalar_lea.vmem %s0, %s149
      %p151 = pneg %p35
      %p152 = pneg %p32
      %p153 = pneg %p56
      %p154 = pneg %p53
      %p155 = pneg %p77
      %p156 = pneg %p74
      %p157 = pneg %p103
      %p158 = pneg %p100
      %s159 = smul.u32 8, %s14
      %p160 = scmp.lt.s32.totalorder %s159, 15
      %s161 = scalar_select %p160, %s159, 15
      %s162 = smul.addr %s161, 2
      %s163 = smul.addr %s162, 8
      %s164 = scalar_lea.vmem %s3, %s163
      %s165 = smul.u32 8, %s14
      %p166 = scmp.lt.s32.totalorder %s165, 15
      %s167 = scalar_select %p166, %s165, 15
      %s168 = smul.addr %s167, 5
      %s169 = smul.addr %s168, 8
      %s170 = scalar_lea.vmem %s0, %s169
      %s171 = smul.u32 8, %s14
      %s172 = smul.u32 8, %s14
      %p173 = scmp.lt.s32.totalorder %s172, 15
      %s174 = scalar_select %p173, %s172, 15
      %s175 = smul.addr %s174, 2
      %s176 = smul.addr %s175, 8
      %s177 = scalar_lea.vmem %s3, %s176
      %s178 = smul.u32 8, %s14
      %v180 = vld [vmem:[%s170] sm:$0xff]
      %v181 = vld [vmem:[%s170 + $0x8] sm:$0xff]
      %v182 = vld [vmem:[%s170 + $0x10] sm:$0xff]
      %v183 = vld [vmem:[%s170 + $0x18] sm:$0xff]
      %v184 = vld [vmem:[%s170 + $0x20] sm:$0xff]
      %v185 = vld [vmem:[%s170 + $0x28] sm:$0xff]
      %v186 = vld [vmem:[%s170 + $0x30] sm:$0xff]
      %v187 = vld [vmem:[%s170 + $0x38] sm:$0xff]
      %v188 = vld [vmem:[%s170 + $0x40] sm:$0xff]
      %v189 = vld [vmem:[%s170 + $0x48] sm:$0xff]
      %v190 = vld [vmem:[%s170 + $0x50] sm:$0xff]
      %v191 = vld [vmem:[%s170 + $0x58] sm:$0xff]
      %v192 = vld [vmem:[%s170 + $0x60] sm:$0xff]
      %v193 = vld [vmem:[%s170 + $0x68] sm:$0xff]
      %v194 = vld [vmem:[%s170 + $0x70] sm:$0xff]
      %v195 = vld [vmem:[%s170 + $0x78] sm:$0xff]
      %v196 = vld [vmem:[%s170 + $0x80] sm:$0xff]
      %v197 = vld [vmem:[%s170 + $0x88] sm:$0xff]
      %v198 = vld [vmem:[%s170 + $0x90] sm:$0xff]
      %v199 = vld [vmem:[%s170 + $0x98] sm:$0xff]
      %v200 = vld [vmem:[%s170 + $0xa0] sm:$0xff]
      %v201 = vld [vmem:[%s170 + $0xa8] sm:$0xff]
      %v202 = vld [vmem:[%s170 + $0xb0] sm:$0xff]
      %v203 = vld [vmem:[%s170 + $0xb8] sm:$0xff]
      %v204 = vld [vmem:[%s170 + $0xc0] sm:$0xff]
      %v205 = vld [vmem:[%s170 + $0xc8] sm:$0xff]
      %v206 = vld [vmem:[%s170 + $0xd0] sm:$0xff]
      %v207 = vld [vmem:[%s170 + $0xd8] sm:$0xff]
      %v208 = vld [vmem:[%s170 + $0xe0] sm:$0xff]
      %v209 = vld [vmem:[%s170 + $0xe8] sm:$0xff]
      %v210 = vld [vmem:[%s170 + $0xf0] sm:$0xff]
      %v211 = vld [vmem:[%s170 + $0xf8] sm:$0xff]
      %v212 = vld [vmem:[%s170 + $0x100] sm:$0xff]
      %v213 = vld [vmem:[%s170 + $0x108] sm:$0xff]
      %v214 = vld [vmem:[%s170 + $0x110] sm:$0xff]
      %v215 = vld [vmem:[%s170 + $0x118] sm:$0xff]
      %v216 = vld [vmem:[%s170 + $0x120] sm:$0xff]
      %v217 = vld [vmem:[%s170 + $0x128] sm:$0xff]
      %v218 = vld [vmem:[%s170 + $0x130] sm:$0xff]
      %v219 = vld [vmem:[%s170 + $0x138] sm:$0xff]
      %v220 = vpack.c.bf16 %v185, %v180
      %v221 = vpack.c.bf16 %v186, %v181
      %v222 = vpack.c.bf16 %v187, %v182
      %v223 = vpack.c.bf16 %v188, %v183
      %v224 = vpack.c.bf16 %v189, %v184
      %v225 = vpack.c.bf16 %v195, %v190
      %v226 = vpack.c.bf16 %v196, %v191
      %v227 = vpack.c.bf16 %v197, %v192
      %v228 = vpack.c.bf16 %v198, %v193
      %v229 = vpack.c.bf16 %v199, %v194
      %v230 = vpack.c.bf16 %v205, %v200
      %v231 = vpack.c.bf16 %v206, %v201
      %v232 = vpack.c.bf16 %v207, %v202
      %v233 = vpack.c.bf16 %v208, %v203
      %v234 = vpack.c.bf16 %v209, %v204
      %v235 = vpack.c.bf16 %v215, %v210
      %v236 = vpack.c.bf16 %v216, %v211
      %v237 = vpack.c.bf16 %v217, %v212
      %v238 = vpack.c.bf16 %v218, %v213
      %v239 = vpack.c.bf16 %v219, %v214
      %v240 = vld [vmem:[%s1] sm:$0xf]
      %v241 = vld [vmem:[%s1 + $0x4] sm:$0xf]
      %v242 = vld [vmem:[%s1 + $0x8] sm:$0xf]
      %v243 = vld [vmem:[%s1 + $0xc] sm:$0xf]
      %v244 = vld [vmem:[%s1 + $0x10] sm:$0xf]
      %v245 = vld [vmem:[%s1 + $0x14] sm:$0xf]
      %v246 = vld [vmem:[%s1 + $0x18] sm:$0xf]
      %v247 = vld [vmem:[%s1 + $0x1c] sm:$0xf]
      %v248 = vld [vmem:[%s1 + $0x20] sm:$0xf]
      %v249 = vld [vmem:[%s1 + $0x24] sm:$0xf]
      %v250 = vld [vmem:[%s1 + $0x28] sm:$0xf]
      %v251 = vld [vmem:[%s1 + $0x2c] sm:$0xf]
      %v252 = vld [vmem:[%s1 + $0x30] sm:$0xf]
      %v253 = vld [vmem:[%s1 + $0x34] sm:$0xf]
      %v254 = vld [vmem:[%s1 + $0x38] sm:$0xf]
      %v255 = vld [vmem:[%s1 + $0x3c] sm:$0xf]
      %v256 = vld [vmem:[%s1 + $0x40] sm:$0xf]
      %v257 = vld [vmem:[%s1 + $0x44] sm:$0xf]
      %v258 = vld [vmem:[%s1 + $0x48] sm:$0xf]
      %v259 = vld [vmem:[%s1 + $0x4c] sm:$0xf]
      %v260 = vld [vmem:[%s1 + $0x50] sm:$0xf]
      %v261 = vld [vmem:[%s1 + $0x54] sm:$0xf]
      %v262 = vld [vmem:[%s1 + $0x58] sm:$0xf]
      %v263 = vld [vmem:[%s1 + $0x5c] sm:$0xf]
      %v264 = vld [vmem:[%s1 + $0x60] sm:$0xf]
      %v265 = vld [vmem:[%s1 + $0x64] sm:$0xf]
      %v266 = vld [vmem:[%s1 + $0x68] sm:$0xf]
      %v267 = vld [vmem:[%s1 + $0x6c] sm:$0xf]
      %v268 = vld [vmem:[%s1 + $0x70] sm:$0xf]
      %v269 = vld [vmem:[%s1 + $0x74] sm:$0xf]
      %v270 = vld [vmem:[%s1 + $0x78] sm:$0xf]
      %v271 = vld [vmem:[%s1 + $0x7c] sm:$0xf]
      %v272 = vld [vmem:[%s1 + $0x80] sm:$0xf]
      %v273 = vld [vmem:[%s1 + $0x84] sm:$0xf]
      %v274 = vld [vmem:[%s1 + $0x88] sm:$0xf]
      %v275 = vld [vmem:[%s1 + $0x8c] sm:$0xf]
      %v276 = vld [vmem:[%s1 + $0x90] sm:$0xf]
      %v277 = vld [vmem:[%s1 + $0x94] sm:$0xf]
      %v278 = vld [vmem:[%s1 + $0x98] sm:$0xf]
      %v279 = vld [vmem:[%s1 + $0x9c] sm:$0xf]
      %v280 = vld [vmem:[%s1 + $0xa0] sm:$0xf]
      %v281 = vld [vmem:[%s1 + $0xa4] sm:$0xf]
      %v282 = vld [vmem:[%s1 + $0xa8] sm:$0xf]
      %v283 = vld [vmem:[%s1 + $0xac] sm:$0xf]
      %v284 = vld [vmem:[%s1 + $0xb0] sm:$0xf]
      %v285 = vld [vmem:[%s1 + $0xb4] sm:$0xf]
      %v286 = vld [vmem:[%s1 + $0xb8] sm:$0xf]
      %v287 = vld [vmem:[%s1 + $0xbc] sm:$0xf]
      %v288 = vld [vmem:[%s1 + $0xc0] sm:$0xf]
      %v289 = vld [vmem:[%s1 + $0xc4] sm:$0xf]
      %v290 = vld [vmem:[%s1 + $0xc8] sm:$0xf]
      %v291 = vld [vmem:[%s1 + $0xcc] sm:$0xf]
      %v292 = vld [vmem:[%s1 + $0xd0] sm:$0xf]
      %v293 = vld [vmem:[%s1 + $0xd4] sm:$0xf]
      %v294 = vld [vmem:[%s1 + $0xd8] sm:$0xf]
      %v295 = vld [vmem:[%s1 + $0xdc] sm:$0xf]
      %v296 = vld [vmem:[%s1 + $0xe0] sm:$0xf]
      %v297 = vld [vmem:[%s1 + $0xe4] sm:$0xf]
      %v298 = vld [vmem:[%s1 + $0xe8] sm:$0xf]
      %v299 = vld [vmem:[%s1 + $0xec] sm:$0xf]
      %v300 = vld [vmem:[%s1 + $0xf0] sm:$0xf]
      %v301 = vld [vmem:[%s1 + $0xf4] sm:$0xf]
      %v302 = vld [vmem:[%s1 + $0xf8] sm:$0xf]
      %v303 = vld [vmem:[%s1 + $0xfc] sm:$0xf]
      %v304 = vld [vmem:[%s1 + $0x100] sm:$0xf]
      %v305 = vld [vmem:[%s1 + $0x104] sm:$0xf]
      %v306 = vld [vmem:[%s1 + $0x108] sm:$0xf]
      %v307 = vld [vmem:[%s1 + $0x10c] sm:$0xf]
      %v308 = vld [vmem:[%s1 + $0x110] sm:$0xf]
      %v309 = vld [vmem:[%s1 + $0x114] sm:$0xf]
      %v310 = vld [vmem:[%s1 + $0x118] sm:$0xf]
      %v311 = vld [vmem:[%s1 + $0x11c] sm:$0xf]
      %v312 = vld [vmem:[%s2] sm:$0x1]
      %v314 = vperm.slane %v312, 0
      %v388 = vunpack.c.l.b16 %v240
      %v389 = vunpack.c.l.b16 %v241
      %v390 = vunpack.c.l.b16 %v242
      %v391 = vunpack.c.l.b16 %v243
      %v392 = vunpack.c.l.b16 %v244
      %v393 = vunpack.c.l.b16 %v245
      %v394 = vunpack.c.l.b16 %v246
      %v395 = vunpack.c.l.b16 %v247
      %v396 = vunpack.c.l.b16 %v248
      %v397 = vunpack.c.l.b16 %v249
      %v398 = vunpack.c.l.b16 %v250
      %v399 = vunpack.c.l.b16 %v251
      %v400 = vunpack.c.l.b16 %v252
      %v401 = vunpack.c.l.b16 %v253
      %v402 = vunpack.c.l.b16 %v254
      %v403 = vunpack.c.l.b16 %v255
      %v404 = vunpack.c.l.b16 %v256
      %v405 = vunpack.c.l.b16 %v257
      %v406 = vunpack.c.l.b16 %v258
      %v407 = vunpack.c.l.b16 %v259
      %v408 = vunpack.c.l.b16 %v260
      %v409 = vunpack.c.l.b16 %v261
      %v410 = vunpack.c.l.b16 %v262
      %v411 = vunpack.c.l.b16 %v263
      %v412 = vunpack.c.l.b16 %v264
      %v413 = vunpack.c.l.b16 %v265
      %v414 = vunpack.c.l.b16 %v266
      %v415 = vunpack.c.l.b16 %v267
      %v416 = vunpack.c.l.b16 %v268
      %v417 = vunpack.c.l.b16 %v269
      %v418 = vunpack.c.l.b16 %v270
      %v419 = vunpack.c.l.b16 %v271
      %v420 = vunpack.c.l.b16 %v272
      %v421 = vunpack.c.l.b16 %v273
      %v422 = vunpack.c.l.b16 %v274
      %v423 = vunpack.c.l.b16 %v275
      %v424 = vunpack.c.l.b16 %v276
      %v425 = vunpack.c.l.b16 %v277
      %v426 = vunpack.c.l.b16 %v278
      %v427 = vunpack.c.l.b16 %v279
      %v428 = vunpack.c.l.b16 %v280
      %v429 = vunpack.c.l.b16 %v281
      %v430 = vunpack.c.l.b16 %v282
      %v431 = vunpack.c.l.b16 %v283
      %v432 = vunpack.c.l.b16 %v284
      %v433 = vunpack.c.l.b16 %v285
      %v434 = vunpack.c.l.b16 %v286
      %v435 = vunpack.c.l.b16 %v287
      %v436 = vunpack.c.l.b16 %v288
      %v437 = vunpack.c.l.b16 %v289
      %v438 = vunpack.c.l.b16 %v290
      %v439 = vunpack.c.l.b16 %v291
      %v440 = vunpack.c.l.b16 %v292
      %v441 = vunpack.c.l.b16 %v293
      %v442 = vunpack.c.l.b16 %v294
      %v443 = vunpack.c.l.b16 %v295
      %v444 = vunpack.c.l.b16 %v296
      %v445 = vunpack.c.l.b16 %v297
      %v446 = vunpack.c.l.b16 %v298
      %v447 = vunpack.c.l.b16 %v299
      %v448 = vunpack.c.l.b16 %v300
      %v449 = vunpack.c.l.b16 %v301
      %v450 = vunpack.c.l.b16 %v302
      %v451 = vunpack.c.l.b16 %v303
      %v452 = vunpack.c.l.b16 %v304
      %v453 = vunpack.c.l.b16 %v305
      %v454 = vunpack.c.l.b16 %v306
      %v455 = vunpack.c.l.b16 %v307
      %v456 = vunpack.c.l.b16 %v308
      %v457 = vunpack.c.l.b16 %v309
      %v458 = vunpack.c.l.b16 %v310
      %v459 = vunpack.c.l.b16 %v311
      %v460 = vpack.c.b16 %v389, %v388
      %v461 = vpack.c.b16 %v391, %v390
      %v462 = vpack.c.b16 %v393, %v392
      %v463 = vpack.c.b16 %v395, %v394
      %v464 = vpack.c.b16 %v397, %v396
      %v465 = vpack.c.b16 %v399, %v398
      %v466 = vpack.c.b16 %v401, %v400
      %v467 = vpack.c.b16 %v403, %v402
      %v468 = vpack.c.b16 %v405, %v404
      %v469 = vpack.c.b16 %v407, %v406
      %v470 = vpack.c.b16 %v409, %v408
      %v471 = vpack.c.b16 %v411, %v410
      %v472 = vpack.c.b16 %v413, %v412
      %v473 = vpack.c.b16 %v415, %v414
      %v474 = vpack.c.b16 %v417, %v416
      %v475 = vpack.c.b16 %v419, %v418
      %v476 = vpack.c.b16 %v421, %v420
      %v477 = vpack.c.b16 %v423, %v422
      %v478 = vpack.c.b16 %v425, %v424
      %v479 = vpack.c.b16 %v427, %v426
      %v480 = vpack.c.b16 %v429, %v428
      %v481 = vpack.c.b16 %v431, %v430
      %v482 = vpack.c.b16 %v433, %v432
      %v483 = vpack.c.b16 %v435, %v434
      %v484 = vpack.c.b16 %v437, %v436
      %v485 = vpack.c.b16 %v439, %v438
      %v486 = vpack.c.b16 %v441, %v440
      %v487 = vpack.c.b16 %v443, %v442
      %v488 = vpack.c.b16 %v445, %v444
      %v489 = vpack.c.b16 %v447, %v446
      %v490 = vpack.c.b16 %v449, %v448
      %v491 = vpack.c.b16 %v451, %v450
      %v492 = vpack.c.b16 %v453, %v452
      %v493 = vpack.c.b16 %v455, %v454
      %v494 = vpack.c.b16 %v457, %v456
      %v495 = vpack.c.b16 %v459, %v458
      %vm532 = vcmask 523264
      %v534 = vsel %vm532, %v224, 0
      %v537 = vsel %vm532, %v229, 0
      %v540 = vsel %vm532, %v234, 0
      %v543 = vsel %vm532, %v239, 0
      %545 = vmatpush.bf16.msra.mxu0 %v467
      %546 = vmatpush.bf16.msra.mxu0 %v466
      %547 = vmatpush.bf16.msra.mxu0 %v465
      %548 = vmatpush.bf16.msra.mxu0 %v464
      %549 = vmatpush.bf16.msra.mxu0 %v463
      %550 = vmatpush.bf16.msra.mxu0 %v462
      %551 = vmatpush.bf16.msra.mxu0 %v461
      %552 = vmatpush.bf16.msra.mxu0 %v460
      %553 = vmatmul.bf16.gmra.mxu0 %v220
      %v554 = vpop.f32.mrf.mxu0
      %v555 = vadd.f32 %v314, %v554
      %v556 = vpop.f32.mrf.mxu0
      %v557 = vadd.f32 %v314, %v556
      %558 = vmatmul.bf16.gmra.mxu0 %v225
      %v559 = vpop.f32.mrf.mxu0
      %v560 = vadd.f32 %v314, %v559
      %v561 = vpop.f32.mrf.mxu0
      %v562 = vadd.f32 %v314, %v561
      %563 = vmatmul.bf16.gmra.mxu0 %v230
      %v564 = vpop.f32.mrf.mxu0
      %v565 = vadd.f32 %v314, %v564
      %v566 = vpop.f32.mrf.mxu0
      %v567 = vadd.f32 %v314, %v566
      %568 = vmatmul.bf16.gmra.mxu0 %v235
      %v569 = vpop.f32.mrf.mxu0
      %v570 = vadd.f32 %v314, %v569
      %v571 = vpop.f32.mrf.mxu0
      %v572 = vadd.f32 %v314, %v571
      %573 = vdwg.mxu0
      %574 = vmatpush.bf16.msra.mxu0 %v475
      %575 = vmatpush.bf16.msra.mxu0 %v474
      %576 = vmatpush.bf16.msra.mxu0 %v473
      %577 = vmatpush.bf16.msra.mxu0 %v472
      %578 = vmatpush.bf16.msra.mxu0 %v471
      %579 = vmatpush.bf16.msra.mxu0 %v470
      %580 = vmatpush.bf16.msra.mxu0 %v469
      %581 = vmatpush.bf16.msra.mxu0 %v468
      %582 = vmatmul.bf16.gmra.mxu0 %v221
      %v583 = vpop.f32.mrf.mxu0
      %v584 = vadd.f32 %v555, %v583
      %v585 = vpop.f32.mrf.mxu0
      %v586 = vadd.f32 %v557, %v585
      %587 = vmatmul.bf16.gmra.mxu0 %v226
      %v588 = vpop.f32.mrf.mxu0
      %v589 = vadd.f32 %v560, %v588
      %v590 = vpop.f32.mrf.mxu0
      %v591 = vadd.f32 %v562, %v590
      %592 = vmatmul.bf16.gmra.mxu0 %v231
      %v593 = vpop.f32.mrf.mxu0
      %v594 = vadd.f32 %v565, %v593
      %v595 = vpop.f32.mrf.mxu0
      %v596 = vadd.f32 %v567, %v595
      %597 = vmatmul.bf16.gmra.mxu0 %v236
      %v598 = vpop.f32.mrf.mxu0
      %v599 = vadd.f32 %v570, %v598
      %v600 = vpop.f32.mrf.mxu0
      %v601 = vadd.f32 %v572, %v600
      %602 = vdwg.mxu0
      %603 = vmatpush.bf16.msra.mxu0 %v483
      %604 = vmatpush.bf16.msra.mxu0 %v482
      %605 = vmatpush.bf16.msra.mxu0 %v481
      %606 = vmatpush.bf16.msra.mxu0 %v480
      %607 = vmatpush.bf16.msra.mxu0 %v479
      %608 = vmatpush.bf16.msra.mxu0 %v478
      %609 = vmatpush.bf16.msra.mxu0 %v477
      %610 = vmatpush.bf16.msra.mxu0 %v476
      %611 = vmatmul.bf16.gmra.mxu0 %v222
      %v612 = vpop.f32.mrf.mxu0
      %v613 = vadd.f32 %v584, %v612
      %v614 = vpop.f32.mrf.mxu0
      %v615 = vadd.f32 %v586, %v614
      %616 = vmatmul.bf16.gmra.mxu0 %v227
      %v617 = vpop.f32.mrf.mxu0
      %v618 = vadd.f32 %v589, %v617
      %v619 = vpop.f32.mrf.mxu0
      %v620 = vadd.f32 %v591, %v619
      %621 = vmatmul.bf16.gmra.mxu0 %v232
      %v622 = vpop.f32.mrf.mxu0
      %v623 = vadd.f32 %v594, %v622
      %v624 = vpop.f32.mrf.mxu0
      %v625 = vadd.f32 %v596, %v624
      %626 = vmatmul.bf16.gmra.mxu0 %v237
      %v627 = vpop.f32.mrf.mxu0
      %v628 = vadd.f32 %v599, %v627
      %v629 = vpop.f32.mrf.mxu0
      %v630 = vadd.f32 %v601, %v629
      %631 = vdwg.mxu0
      %632 = vmatpush.bf16.msra.mxu0 %v491
      %633 = vmatpush.bf16.msra.mxu0 %v490
      %634 = vmatpush.bf16.msra.mxu0 %v489
      %635 = vmatpush.bf16.msra.mxu0 %v488
      %636 = vmatpush.bf16.msra.mxu0 %v487
      %637 = vmatpush.bf16.msra.mxu0 %v486
      %638 = vmatpush.bf16.msra.mxu0 %v485
      %639 = vmatpush.bf16.msra.mxu0 %v484
      %640 = vmatmul.bf16.gmra.mxu0 %v223
      %v641 = vpop.f32.mrf.mxu0
      %v642 = vadd.f32 %v613, %v641
      %v643 = vpop.f32.mrf.mxu0
      %v644 = vadd.f32 %v615, %v643
      %645 = vmatmul.bf16.gmra.mxu0 %v228
      %v646 = vpop.f32.mrf.mxu0
      %v647 = vadd.f32 %v618, %v646
      %v648 = vpop.f32.mrf.mxu0
      %v649 = vadd.f32 %v620, %v648
      %650 = vmatmul.bf16.gmra.mxu0 %v233
      %v651 = vpop.f32.mrf.mxu0
      %v652 = vadd.f32 %v623, %v651
      %v653 = vpop.f32.mrf.mxu0
      %v654 = vadd.f32 %v625, %v653
      %655 = vmatmul.bf16.gmra.mxu0 %v238
      %v656 = vpop.f32.mrf.mxu0
      %v657 = vadd.f32 %v628, %v656
      %v658 = vpop.f32.mrf.mxu0
      %v659 = vadd.f32 %v630, %v658
      %660 = vdwg.mxu0
      %661 = vmatpush.bf16.msra.mxu0 0
      %662 = vmatpush.bf16.msra.mxu0 0
      %663 = vmatpush.bf16.msra.mxu0 0
      %664 = vmatpush.bf16.msra.mxu0 0
      %665 = vmatpush.bf16.msra.mxu0 %v495
      %666 = vmatpush.bf16.msra.mxu0 %v494
      %667 = vmatpush.bf16.msra.mxu0 %v493
      %668 = vmatpush.bf16.msra.mxu0 %v492
      %669 = vmatmul.bf16.gmra.mxu0 %v534
      %v670 = vpop.f32.mrf.mxu0
      %v671 = vadd.f32 %v642, %v670
      %v672 = vpop.f32.mrf.mxu0
      %v673 = vadd.f32 %v644, %v672
      %674 = vmatmul.bf16.gmra.mxu0 %v537
      %v675 = vpop.f32.mrf.mxu0
      %v676 = vadd.f32 %v647, %v675
      %v677 = vpop.f32.mrf.mxu0
      %v678 = vadd.f32 %v649, %v677
      %679 = vmatmul.bf16.gmra.mxu0 %v540
      %v680 = vpop.f32.mrf.mxu0
      %v681 = vadd.f32 %v652, %v680
      %v682 = vpop.f32.mrf.mxu0
      %v683 = vadd.f32 %v654, %v682
      %684 = vmatmul.bf16.gmra.mxu0 %v543
      %v685 = vpop.f32.mrf.mxu0
      %v686 = vadd.f32 %v657, %v685
      %v687 = vpop.f32.mrf.mxu0
      %v688 = vadd.f32 %v659, %v687
      %689 = vdwg.mxu0
      %v690 = vmax.f32 %v671, 0.0
      %v691 = vmax.f32 %v673, 0.0
      %v692 = vmax.f32 %v676, 0.0
      %v693 = vmax.f32 %v678, 0.0
      %v694 = vmax.f32 %v681, 0.0
      %v695 = vmax.f32 %v683, 0.0
      %v696 = vmax.f32 %v686, 0.0
      %v697 = vmax.f32 %v688, 0.0
      %706 = vrot.lane.b32.xlu0 %v180, 64
      %v707 = vpop.permute.xlu0 %706
      %708 = vrot.lane.b32.xlu0 %v185, 64
      %v709 = vpop.permute.xlu0 %708
      %710 = vrot.lane.b32.xlu0 %v190, 64
      %v711 = vpop.permute.xlu0 %710
      %712 = vrot.lane.b32.xlu0 %v195, 64
      %v713 = vpop.permute.xlu0 %712
      %714 = vrot.lane.b32.xlu0 %v200, 64
      %v715 = vpop.permute.xlu0 %714
      %716 = vrot.lane.b32.xlu0 %v205, 64
      %v717 = vpop.permute.xlu0 %716
      %718 = vrot.lane.b32.xlu0 %v210, 64
      %v719 = vpop.permute.xlu0 %718
      %720 = vrot.lane.b32.xlu0 %v215, 64
      %v721 = vpop.permute.xlu0 %720
      %v730 = vmax.f32 %v180, %v707
      %v731 = vmax.f32 %v185, %v709
      %v732 = vmax.f32 %v190, %v711
      %v733 = vmax.f32 %v195, %v713
      %v734 = vmax.f32 %v200, %v715
      %v735 = vmax.f32 %v205, %v717
      %v736 = vmax.f32 %v210, %v719
      %v737 = vmax.f32 %v215, %v721
      %v738 = vmax.f32 %v730, %v181
      %v739 = vmax.f32 %v731, %v186
      %v740 = vmax.f32 %v732, %v191
      %v741 = vmax.f32 %v733, %v196
      %v742 = vmax.f32 %v734, %v201
      %v743 = vmax.f32 %v735, %v206
      %v744 = vmax.f32 %v736, %v211
      %v745 = vmax.f32 %v737, %v216
      %754 = vrot.lane.b32.xlu0 %v181, 64
      %v755 = vpop.permute.xlu0 %754
      %756 = vrot.lane.b32.xlu0 %v186, 64
      %v757 = vpop.permute.xlu0 %756
      %758 = vrot.lane.b32.xlu0 %v191, 64
      %v759 = vpop.permute.xlu0 %758
      %760 = vrot.lane.b32.xlu0 %v196, 64
      %v761 = vpop.permute.xlu0 %760
      %762 = vrot.lane.b32.xlu0 %v201, 64
      %v763 = vpop.permute.xlu0 %762
      %764 = vrot.lane.b32.xlu0 %v206, 64
      %v765 = vpop.permute.xlu0 %764
      %766 = vrot.lane.b32.xlu0 %v211, 64
      %v767 = vpop.permute.xlu0 %766
      %768 = vrot.lane.b32.xlu0 %v216, 64
      %v769 = vpop.permute.xlu0 %768
      %v778 = vmax.f32 %v738, %v755
      %v779 = vmax.f32 %v739, %v757
      %v780 = vmax.f32 %v740, %v759
      %v781 = vmax.f32 %v741, %v761
      %v782 = vmax.f32 %v742, %v763
      %v783 = vmax.f32 %v743, %v765
      %v784 = vmax.f32 %v744, %v767
      %v785 = vmax.f32 %v745, %v769
      %v786 = vmax.f32 %v778, %v182
      %v787 = vmax.f32 %v779, %v187
      %v788 = vmax.f32 %v780, %v192
      %v789 = vmax.f32 %v781, %v197
      %v790 = vmax.f32 %v782, %v202
      %v791 = vmax.f32 %v783, %v207
      %v792 = vmax.f32 %v784, %v212
      %v793 = vmax.f32 %v785, %v217
      %802 = vrot.lane.b32.xlu0 %v182, 64
      %v803 = vpop.permute.xlu0 %802
      %804 = vrot.lane.b32.xlu0 %v187, 64
      %v805 = vpop.permute.xlu0 %804
      %806 = vrot.lane.b32.xlu0 %v192, 64
      %v807 = vpop.permute.xlu0 %806
      %808 = vrot.lane.b32.xlu0 %v197, 64
      %v809 = vpop.permute.xlu0 %808
      %810 = vrot.lane.b32.xlu0 %v202, 64
      %v811 = vpop.permute.xlu0 %810
      %812 = vrot.lane.b32.xlu0 %v207, 64
      %v813 = vpop.permute.xlu0 %812
      %814 = vrot.lane.b32.xlu0 %v212, 64
      %v815 = vpop.permute.xlu0 %814
      %816 = vrot.lane.b32.xlu0 %v217, 64
      %v817 = vpop.permute.xlu0 %816
      %v826 = vmax.f32 %v786, %v803
      %v827 = vmax.f32 %v787, %v805
      %v828 = vmax.f32 %v788, %v807
      %v829 = vmax.f32 %v789, %v809
      %v830 = vmax.f32 %v790, %v811
      %v831 = vmax.f32 %v791, %v813
      %v832 = vmax.f32 %v792, %v815
      %v833 = vmax.f32 %v793, %v817
      %v834 = vmax.f32 %v826, %v183
      %v835 = vmax.f32 %v827, %v188
      %v836 = vmax.f32 %v828, %v193
      %v837 = vmax.f32 %v829, %v198
      %v838 = vmax.f32 %v830, %v203
      %v839 = vmax.f32 %v831, %v208
      %v840 = vmax.f32 %v832, %v213
      %v841 = vmax.f32 %v833, %v218
      %850 = vrot.lane.b32.xlu0 %v183, 64
      %v851 = vpop.permute.xlu0 %850
      %852 = vrot.lane.b32.xlu0 %v188, 64
      %v853 = vpop.permute.xlu0 %852
      %854 = vrot.lane.b32.xlu0 %v193, 64
      %v855 = vpop.permute.xlu0 %854
      %856 = vrot.lane.b32.xlu0 %v198, 64
      %v857 = vpop.permute.xlu0 %856
      %858 = vrot.lane.b32.xlu0 %v203, 64
      %v859 = vpop.permute.xlu0 %858
      %860 = vrot.lane.b32.xlu0 %v208, 64
      %v861 = vpop.permute.xlu0 %860
      %862 = vrot.lane.b32.xlu0 %v213, 64
      %v863 = vpop.permute.xlu0 %862
      %864 = vrot.lane.b32.xlu0 %v218, 64
      %v865 = vpop.permute.xlu0 %864
      %v874 = vmax.f32 %v834, %v851
      %v875 = vmax.f32 %v835, %v853
      %v876 = vmax.f32 %v836, %v855
      %v877 = vmax.f32 %v837, %v857
      %v878 = vmax.f32 %v838, %v859
      %v879 = vmax.f32 %v839, %v861
      %v880 = vmax.f32 %v840, %v863
      %v881 = vmax.f32 %v841, %v865
      %v882 = vmax.f32 %v874, %v184
      %v883 = vmax.f32 %v875, %v189
      %v884 = vmax.f32 %v876, %v194
      %v885 = vmax.f32 %v877, %v199
      %v886 = vmax.f32 %v878, %v204
      %v887 = vmax.f32 %v879, %v209
      %v888 = vmax.f32 %v880, %v214
      %v889 = vmax.f32 %v881, %v219
      %890 = vst [vmem:[%s177] sm:$0xff] %v690
      %891 = vst [vmem:[%s177 + $0x10] sm:$0xff] %v691
      %892 = vst [vmem:[%s177 + $0x20] sm:$0xff] %v692
      %893 = vst [vmem:[%s177 + $0x30] sm:$0xff] %v693
      %894 = vst [vmem:[%s177 + $0x40] sm:$0xff] %v694
      %895 = vst [vmem:[%s177 + $0x50] sm:$0xff] %v695
      %896 = vst [vmem:[%s177 + $0x60] sm:$0xff] %v696
      %897 = vst [vmem:[%s177 + $0x70] sm:$0xff] %v697
      %898 = vst.msk [vmem:[%s177 + $0x8] sm:$0xff] %vm532, %v882
      %899 = vst.msk [vmem:[%s177 + $0x18] sm:$0xff] %vm532, %v883
      %900 = vst.msk [vmem:[%s177 + $0x28] sm:$0xff] %vm532, %v884
      %901 = vst.msk [vmem:[%s177 + $0x38] sm:$0xff] %vm532, %v885
      %902 = vst.msk [vmem:[%s177 + $0x48] sm:$0xff] %vm532, %v886
      %903 = vst.msk [vmem:[%s177 + $0x58] sm:$0xff] %vm532, %v887
      %904 = vst.msk [vmem:[%s177 + $0x68] sm:$0xff] %vm532, %v888
      %905 = vst.msk [vmem:[%s177 + $0x78] sm:$0xff] %vm532, %v889
      %s906 = smul.u32 8, %s14
      %p907 = scmp.lt.s32.totalorder %s906, 15
      %s908 = scalar_select %p907, %s906, 15
      %s909 = smul.addr %s908, 2
      %s910 = smul.addr %s909, 8
      %s911 = scalar_lea.vmem %s3, %s910
      // Predicated region
      $region33: #{tpu_custom_call.1} parent=31 // pred_check
        %p912 = pneg %p100
      $region34: #{tpu_custom_call.1} parent=31 // pred_check_branch
        %914 = sbr.rel (%p912) target = $region36
      $region35: #{tpu_custom_call.1} parent=31 // pred_region
        %s915 = smul.u32 8, %s14
      $region36: #{tpu_custom_call.1} parent=31 // pred_fallthru
        _
    $region32: #{tpu_custom_call.1} parent=5 // pred_fallthru
      _
    %p916 = scmp.le.s32.totalorder 2, %s9
    // Predicated region
    $region37: #{tpu_custom_call.1} parent=5 // pred_check
      %p917 = pneg %p916
    $region38: #{tpu_custom_call.1} parent=5 // pred_check_branch
      %919 = sbr.rel (%p917) target = $region40
    $region39: #{tpu_custom_call.1} parent=5 // pred_region
      %s920 = ssub.s32 %s9, 2
      // Predicated region
      $region41: #{tpu_custom_call.1} parent=39 // pred_check
        %p921 = pneg %p106
      $region42: #{tpu_custom_call.1} parent=39 // pred_check_branch
        %923 = sbr.rel (%p921) target = $region44
      $region43: #{tpu_custom_call.1} parent=39 // pred_region
        %s924 = smul.u32 8, %s15
        %p925 = scmp.lt.s32.totalorder %s924, 15
        %s926 = scalar_select %p925, %s924, 15
        %s927 = smul.addr %s926, 2
        %s928 = smul.addr %s927, 8
        %s929 = scalar_lea.vmem %s3, %s928
      $region44: #{tpu_custom_call.1} parent=39 // pred_fallthru
        _
    $region40: #{tpu_custom_call.1} parent=5 // pred_fallthru
      _
  $region6: #{tpu_custom_call.1} parent=0 // loop_footer
    %s13 = sadd.s32 1, %s9
  $region7: #{tpu_custom_call.1} parent=0 // loop_footer_branch
    %8 = sbr.rel target = $region3
  $region8: #{tpu_custom_call.1} parent=0 // loop_exit
    _

</llo_original>
